<compile_context>
chip_gen: v7x
topology: tpu7x:2x2x1
jax: 0.10.0
libtpu: 0.0.40
codegen_flags: <defaults>
</compile_context>

<pallas_src>
import math

import jax
import jax.numpy as jnp
from jax import lax
from jax.experimental import pallas as pl
from jax.experimental.pallas import tpu as pltpu


def _round_up(x, m):
    return ((x + m - 1) // m) * m


def _plan_axis(dim, target, align, min_blocks=1):
    """Pick (tile, padded_dim) for one grid axis.

    Guarantees padded_dim % tile == 0 and either tile % align == 0 or
    tile == padded_dim (full-extent block, always legal).
    """
    if dim <= target:
        if min_blocks > 1 and dim > 4 * align:
            tile = _round_up(-(-dim // min_blocks), align)
            return tile, _round_up(dim, tile)
        return dim, dim
    # dim > target: prefer an exact divisor that is a multiple of `align`.
    best = (target // align) * align
    t = best
    while t >= align:
        if dim % t == 0:
            return t, dim
        t -= align
    # No usable divisor: pad up to a multiple of the target tile.
    return best, _round_up(dim, best)


def _complex_linear_kernel(x_ref, w_ref, o_ref, acc_ref):
    # x_ref:   (2, tm, tk)  -- [x_real ; x_imag] stacked on the leading axis
    # w_ref:   (2, tk, tn)  -- [Wr^T   ; Wi^T]   (already (in, out) layout)
    # o_ref:   (2, tm, tn)  -- [out_real ; out_imag]
    # acc_ref: (2, tm, tn)  f32 accumulator
    k = pl.program_id(2)

    @pl.when(k == 0)
    def _init():
        acc_ref[...] = jnp.zeros_like(acc_ref)

    _, tm, tk = x_ref.shape
    # Layout-free fold of the real/imag axis into the sublane (M) axis: two MXU
    # matmuls with doubled M fill instead of four small ones, no VMEM copy.
    x2 = x_ref[...].reshape(2 * tm, tk)          # [xr ; xi]   (2*tm, tk)
    wr = w_ref[0]                                # (tk, tn)  == Wr^T tile
    wi = w_ref[1]                                # (tk, tn)  == Wi^T tile

    pr = jnp.dot(x2, wr, preferred_element_type=jnp.float32)  # [xr@WrT ; xi@WrT]
    pi = jnp.dot(x2, wi, preferred_element_type=jnp.float32)  # [xr@WiT ; xi@WiT]

    acc_ref[0] += pr[:tm] - pi[tm:]              # real: rr - ii
    acc_ref[1] += pr[tm:] + pi[:tm]              # imag: ir + ri

    @pl.when(k == pl.num_programs(2) - 1)
    def _finalize():
        o_ref[...] = acc_ref[...].astype(o_ref.dtype)


def complex_linear(x_real, x_imag, w_real, w_imag, *,
                   compute_dtype=None,
                   tm_target=512, tn_target=512, tk_target=512):
    """Pallas ComplexLinear.

    Args:
      x_real, x_imag: (..., in_features)
      w_real, w_imag: (out_features, in_features)   (PyTorch nn.Linear layout)
      compute_dtype:  dtype for the matmul operands (cast HBM-side). Default is
        the input dtype (exact PyTorch semantics). Passing jnp.bfloat16 halves
        HBM traffic and uses the fast bf16 MXU path (f32 accumulation).
    Returns:
      (out_real, out_imag), each (..., out_features), in the input dtype.
    """
    out_f, in_f = w_real.shape
    lead = x_real.shape[:-1]
    assert x_real.shape[-1] == in_f and x_imag.shape == x_real.shape
    assert w_imag.shape == w_real.shape

    out_dtype = x_real.dtype
    if compute_dtype is None:
        compute_dtype = out_dtype

    B = int(math.prod(lead)) if lead else 1

    # --- tiling / padding plan ------------------------------------------------
    B8 = _round_up(B, 8)                       # keep the (2,tm,tk) fold layout-free
    m_min_blocks = 2 if B8 > 256 else 1        # give v7x's second TC work
    tm, Bp = _plan_axis(B8, tm_target, 8, m_min_blocks)
    tn, Np = _plan_axis(out_f, tn_target, 128)
    tk, Kp = _plan_axis(in_f, tk_target, 128)
    grid = (Bp // tm, Np // tn, Kp // tk)

    # --- operand prep (all HBM-side, paid once per call) ----------------------
    xr2 = x_real.reshape(B, in_f)
    xi2 = x_imag.reshape(B, in_f)
    x2 = jnp.stack([xr2, xi2], axis=0).astype(compute_dtype)          # (2, B, K)
    w2 = jnp.stack([w_real, w_imag], axis=0).swapaxes(1, 2)           # (2, K, N)
    w2 = w2.astype(compute_dtype)

    if Bp != B or Kp != in_f:
        x2 = jnp.pad(x2, ((0, 0), (0, Bp - B), (0, Kp - in_f)))
    if Kp != in_f or Np != out_f:
        w2 = jnp.pad(w2, ((0, 0), (0, Kp - in_f), (0, Np - out_f)))

    csize = jnp.dtype(compute_dtype).itemsize
    osize = jnp.dtype(out_dtype).itemsize

    # VMEM footprint: double-buffered in/out blocks + f32 accumulator scratch.
    vmem_footprint = (2 * (2 * tm * tk) * csize
                      + 2 * (2 * tk * tn) * csize
                      + 2 * (2 * tm * tn) * osize
                      + (2 * tm * tn) * 4)
    vmem_limit = int(min(max(2 * vmem_footprint + (4 << 20), 16 << 20), 48 << 20))

    gm, gn = grid[0], grid[1]
    cost = pl.CostEstimate(
        flops=8 * Bp * Kp * Np,                       # two (2B,K)x(K,N) matmuls
        transcendentals=0,
        bytes_accessed=(2 * Bp * Kp * csize) * gn     # activations re-fetched per N block
                       + (2 * Kp * Np * csize) * gm   # weights re-fetched per M block
                       + (2 * Bp * Np * osize),
    )

    out = pl.pallas_call(
        _complex_linear_kernel,
        out_shape=jax.ShapeDtypeStruct((2, Bp, Np), out_dtype),
        grid_spec=pltpu.PrefetchScalarGridSpec(
            num_scalar_prefetch=0,
            grid=grid,
            in_specs=[
                pl.BlockSpec((2, tm, tk), lambda m, n, k: (0, m, k)),   # [xr;xi]
                pl.BlockSpec((2, tk, tn), lambda m, n, k: (0, k, n)),   # [WrT;WiT]
            ],
            out_specs=pl.BlockSpec((2, tm, tn), lambda m, n, k: (0, m, n)),
            scratch_shapes=[
                pltpu.VMEM((2, tm, tn), jnp.float32),   # fused real/imag accumulator
            ],
        ),
        compiler_params=pltpu.CompilerParams(
            dimension_semantics=("parallel", "parallel", "arbitrary"),
            vmem_limit_bytes=vmem_limit,
        ),
        cost_estimate=cost,
    )(x2, w2)

    out_shape = lead + (out_f,)
    out_real = out[0, :B, :out_f].reshape(out_shape)
    out_imag = out[1, :B, :out_f].reshape(out_shape)
    return out_real, out_imag


if __name__ == "__main__":
    key = jax.random.PRNGKey(0)
    k1, k2, k3, k4 = jax.random.split(key, 4)

    lead = (2, 8)                 # leading dims are flattened to B = 16 internally
    in_features = 32
    out_features = 32

    x_real = jax.random.normal(k1, lead + (in_features,), dtype=jnp.float32)
    x_imag = jax.random.normal(k2, lead + (in_features,), dtype=jnp.float32)

    # PyTorch nn.Linear weight layout: (out_features, in_features).
    bound = 1.0 / (in_features ** 0.5)
    w_real = jax.random.uniform(k3, (out_features, in_features), jnp.float32,
                                -bound, bound)
    w_imag = jax.random.uniform(k4, (out_features, in_features), jnp.float32,
                                -bound, bound)

    # f32 path (matches the PyTorch forward).
    out_real, out_imag = complex_linear(x_real, x_imag, w_real, w_imag)
    out_real, out_imag = jax.block_until_ready((out_real, out_imag))

    hp = lax.Precision.HIGHEST
    rr = jnp.einsum("...k,nk->...n", x_real, w_real, precision=hp)
    ri = jnp.einsum("...k,nk->...n", x_real, w_imag, precision=hp)
    ir = jnp.einsum("...k,nk->...n", x_imag, w_real, precision=hp)
    ii = jnp.einsum("...k,nk->...n", x_imag, w_imag, precision=hp)
    ref_real = rr - ii
    ref_imag = ir + ri

    assert out_real.shape == ref_real.shape and out_imag.shape == ref_imag.shape
    assert bool(jnp.allclose(out_real, ref_real, atol=1e-4, rtol=1e-4)), (
        "real mismatch", float(jnp.max(jnp.abs(out_real - ref_real))))
    assert bool(jnp.allclose(out_imag, ref_imag, atol=1e-4, rtol=1e-4)), (
        "imag mismatch", float(jnp.max(jnp.abs(out_imag - ref_imag))))

    # Fast bf16 compute path (wrapper-side cast, f32 accumulation) -- looser tol.
    br, bi = complex_linear(x_real, x_imag, w_real, w_imag,
                            compute_dtype=jnp.bfloat16)
    br, bi = jax.block_until_ready((br, bi))
    assert bool(jnp.allclose(br, ref_real, atol=5e-2, rtol=5e-2))
    assert bool(jnp.allclose(bi, ref_imag, atol=5e-2, rtol=5e-2))

    print("KERNEL_OK")
</pallas_src>

<mosaic_0001>
module attributes {stable_mosaic.version = 11 : i64} {
  func.func @_complex_linear_kernel(%arg0: i32, %arg1: i32, %arg2: i32, %arg3: memref<2x16x32xf32, #tpu.memory_space<vmem>>, %arg4: memref<2x32x32xf32, #tpu.memory_space<vmem>>, %arg5: memref<2x16x32xf32, #tpu.memory_space<vmem>>, %arg6: memref<2x16x32xf32, #tpu.memory_space<vmem>>) attributes {dimension_semantics = [#tpu.dimension_semantics<parallel>, #tpu.dimension_semantics<parallel>, #tpu.dimension_semantics<arbitrary>], iteration_bounds = array<i64: 1, 1, 1>, scalar_prefetch = 0 : i64, scratch_operands = 1 : i64, tpu.core_type = #tpu.core_type<tc>, window_params = [{transform_indices = @transform_0, window_bounds = array<i64: 2, 16, 32>}, {transform_indices = @transform_1, window_bounds = array<i64: 2, 32, 32>}, {transform_indices = @transform_2, window_bounds = array<i64: 2, 16, 32>}]} {
    %c0_i32 = arith.constant 0 : i32
    %0 = arith.cmpi eq, %arg2, %c0_i32 : i32
    %1 = arith.extui %0 : i1 to i32
    %c0_i32_0 = arith.constant 0 : i32
    %2 = arith.cmpi ne, %1, %c0_i32_0 : i32
    scf.if %2 {
      %cst_23 = arith.constant 0.000000e+00 : f32
      %32 = vector.broadcast %cst_23 : f32 to vector<2x16x32xf32>
      %c0_24 = arith.constant 0 : index
      %c0_25 = arith.constant 0 : index
      %c0_26 = arith.constant 0 : index
      %33 = vector.load %arg6[%c0_24, %c0_25, %c0_26] : memref<2x16x32xf32, #tpu.memory_space<vmem>>, vector<2x16x32xf32>
      tpu.vector_store %arg6[%c0_24, %c0_25, %c0_26], %32 {strides = array<i32>} : memref<2x16x32xf32, #tpu.memory_space<vmem>>, vector<2x16x32xf32>,
    } else {
    }
    %c0 = arith.constant 0 : index
    %c0_1 = arith.constant 0 : index
    %c0_2 = arith.constant 0 : index
    %3 = vector.load %arg3[%c0, %c0_1, %c0_2] : memref<2x16x32xf32, #tpu.memory_space<vmem>>, vector<2x16x32xf32>
    %4 = vector.shape_cast %3 : vector<2x16x32xf32> to vector<32x32xf32>
    %c0_3 = arith.constant 0 : index
    %c0_4 = arith.constant 0 : index
    %c0_5 = arith.constant 0 : index
    %5 = vector.load %arg4[%c0_3, %c0_4, %c0_5] : memref<2x32x32xf32, #tpu.memory_space<vmem>>, vector<1x32x32xf32>
    %6 = vector.shape_cast %5 : vector<1x32x32xf32> to vector<32x32xf32>
    %c1 = arith.constant 1 : index
    %c0_6 = arith.constant 0 : index
    %c0_7 = arith.constant 0 : index
    %7 = vector.load %arg4[%c1, %c0_6, %c0_7] : memref<2x32x32xf32, #tpu.memory_space<vmem>>, vector<1x32x32xf32>
    %8 = vector.shape_cast %7 : vector<1x32x32xf32> to vector<32x32xf32>
    %cst = arith.constant dense<0.000000e+00> : vector<32x32xf32>
    %9 = tpu.matmul %4, %6, %cst {dimension_numbers = #tpu.dot_dimension_numbers<[1], [0], [0], [1], [0, 0, 1, 1], [], []>} : vector<32x32xf32>, vector<32x32xf32>, vector<32x32xf32> -> vector<32x32xf32>
    %cst_8 = arith.constant dense<0.000000e+00> : vector<32x32xf32>
    %10 = tpu.matmul %4, %8, %cst_8 {dimension_numbers = #tpu.dot_dimension_numbers<[1], [0], [0], [1], [0, 0, 1, 1], [], []>} : vector<32x32xf32>, vector<32x32xf32>, vector<32x32xf32> -> vector<32x32xf32>
    %c0_9 = arith.constant 0 : index
    %c0_10 = arith.constant 0 : index
    %c0_11 = arith.constant 0 : index
    %11 = vector.load %arg6[%c0_9, %c0_10, %c0_11] : memref<2x16x32xf32, #tpu.memory_space<vmem>>, vector<1x16x32xf32>
    %12 = vector.shape_cast %11 : vector<1x16x32xf32> to vector<16x32xf32>
    %13 = vector.extract_strided_slice %9 {offsets = [0, 0], sizes = [16, 32], strides = [1, 1]} : vector<32x32xf32> to vector<16x32xf32>
    %14 = vector.extract_strided_slice %10 {offsets = [16, 0], sizes = [16, 32], strides = [1, 1]} : vector<32x32xf32> to vector<16x32xf32>
    %15 = arith.subf %13, %14 : vector<16x32xf32>
    %16 = arith.addf %12, %15 : vector<16x32xf32>
    %c0_12 = arith.constant 0 : index
    %c0_13 = arith.constant 0 : index
    %c0_14 = arith.constant 0 : index
    %17 = vector.load %arg6[%c0_12, %c0_13, %c0_14] : memref<2x16x32xf32, #tpu.memory_space<vmem>>, vector<1x16x32xf32>
    %18 = vector.shape_cast %17 : vector<1x16x32xf32> to vector<16x32xf32>
    %19 = vector.shape_cast %16 : vector<16x32xf32> to vector<1x16x32xf32>
    tpu.vector_store %arg6[%c0_12, %c0_13, %c0_14], %19 {strides = array<i32>} : memref<2x16x32xf32, #tpu.memory_space<vmem>>, vector<1x16x32xf32>,
    %c1_15 = arith.constant 1 : index
    %c0_16 = arith.constant 0 : index
    %c0_17 = arith.constant 0 : index
    %20 = vector.load %arg6[%c1_15, %c0_16, %c0_17] : memref<2x16x32xf32, #tpu.memory_space<vmem>>, vector<1x16x32xf32>
    %21 = vector.shape_cast %20 : vector<1x16x32xf32> to vector<16x32xf32>
    %22 = vector.extract_strided_slice %9 {offsets = [16, 0], sizes = [16, 32], strides = [1, 1]} : vector<32x32xf32> to vector<16x32xf32>
    %23 = vector.extract_strided_slice %10 {offsets = [0, 0], sizes = [16, 32], strides = [1, 1]} : vector<32x32xf32> to vector<16x32xf32>
    %24 = arith.addf %22, %23 : vector<16x32xf32>
    %25 = arith.addf %21, %24 : vector<16x32xf32>
    %c1_18 = arith.constant 1 : index
    %c0_19 = arith.constant 0 : index
    %c0_20 = arith.constant 0 : index
    %26 = vector.load %arg6[%c1_18, %c0_19, %c0_20] : memref<2x16x32xf32, #tpu.memory_space<vmem>>, vector<1x16x32xf32>
    %27 = vector.shape_cast %26 : vector<1x16x32xf32> to vector<16x32xf32>
    %28 = vector.shape_cast %25 : vector<16x32xf32> to vector<1x16x32xf32>
    tpu.vector_store %arg6[%c1_18, %c0_19, %c0_20], %28 {strides = array<i32>} : memref<2x16x32xf32, #tpu.memory_space<vmem>>, vector<1x16x32xf32>,
    %c0_i32_21 = arith.constant 0 : i32
    %29 = arith.cmpi eq, %arg2, %c0_i32_21 : i32
    %30 = arith.extui %29 : i1 to i32
    %c0_i32_22 = arith.constant 0 : i32
    %31 = arith.cmpi ne, %30, %c0_i32_22 : i32
    scf.if %31 {
      %c0_23 = arith.constant 0 : index
      %c0_24 = arith.constant 0 : index
      %c0_25 = arith.constant 0 : index
      %32 = vector.load %arg6[%c0_23, %c0_24, %c0_25] : memref<2x16x32xf32, #tpu.memory_space<vmem>>, vector<2x16x32xf32>
      %c0_26 = arith.constant 0 : index
      %c0_27 = arith.constant 0 : index
      %c0_28 = arith.constant 0 : index
      %33 = vector.load %arg5[%c0_26, %c0_27, %c0_28] : memref<2x16x32xf32, #tpu.memory_space<vmem>>, vector<2x16x32xf32>
      tpu.vector_store %arg5[%c0_26, %c0_27, %c0_28], %32 {strides = array<i32>} : memref<2x16x32xf32, #tpu.memory_space<vmem>>, vector<2x16x32xf32>,
    } else {
    }
    return
  }
  func.func @transform_0(%arg0: i32, %arg1: i32, %arg2: i32) -> (i32, i32, i32) {
    %c0_i32 = arith.constant 0 : i32
    %c0_i32_0 = arith.constant 0 : i32
    return %c0_i32, %arg0, %arg2 : i32, i32, i32
  }
  func.func @transform_1(%arg0: i32, %arg1: i32, %arg2: i32) -> (i32, i32, i32) {
    %c0_i32 = arith.constant 0 : i32
    %c0_i32_0 = arith.constant 0 : i32
    return %c0_i32, %arg2, %arg1 : i32, i32, i32
  }
  func.func @transform_2(%arg0: i32, %arg1: i32, %arg2: i32) -> (i32, i32, i32) {
    %c0_i32 = arith.constant 0 : i32
    %c0_i32_0 = arith.constant 0 : i32
    return %c0_i32, %arg0, %arg1 : i32, i32, i32
  }
}

</mosaic_0001>

<llo_original>
// kernel: tpu_custom_call.1
$region0: #{tpu_custom_call.1}
  #allocation0 [shape = 'u32[]', space=smem, size = 0x4, offset = 0x4, fixed_abs, tag = 'smem constant byte address 0x4 - core index']
  #allocation1 [shape = 'u32[144,128]{1,0:T(1,128)}', space=vmem, size = 0x12000, scoped, tag = 'internal scratch']
  #allocation2 [shape = 'f32[2,16,32]{2,1,0:T(8,128)}', space=vmem, size = 0x4000, scoped, tag = 'scratch operand']
  %s0 = inlined_call_operand.hbm [shape: f32[2,16,32], index: 0, kind: input, shape index: {}]
  %s1 = inlined_call_operand.hbm [shape: f32[2,32,32], index: 1, kind: input, shape index: {}]
  %s2 = inlined_call_operand.hbm [shape: f32[2,16,32], index: 2, kind: output, shape index: {}]
  %s3 = sld [smem:[#allocation0]]
  $region34: #{tpu_custom_call.1} parent=0
    _
  %s5 = ssub.s32 1, %s3
  %s6 = scalar_select 0, %s5, %s3
  $region1: #{tpu_custom_call.1} parent=0
    #allocation3 [shape = 'u8[16384]{0}', space=vmem, size = 0x4000, scoped, tag = 'input window, operand 0, single buffered']
    #allocation4 [shape = 's32[1]{0}', space=sflag, size = 0x4, scoped, tag = 'scoped memory for tpu_custom_call.1']
    #allocation5 [shape = 's32[1]{0}', space=sflag, size = 0x4, scoped, tag = 'scoped memory for tpu_custom_call.1']
    #allocation6 [shape = 'u8[32768]{0}', space=vmem, size = 0x8000, scoped, tag = 'input window, operand 1, single buffered']
    #allocation7 [shape = 's32[1]{0}', space=sflag, size = 0x4, scoped, tag = 'scoped memory for tpu_custom_call.1']
    #allocation8 [shape = 'u8[16384]{0}', space=vmem, size = 0x4000, scoped, tag = 'output window, operand 0, single buffered']
    %7 = vsyncpa [#allocation4], 0
    %8 = vsyncpa [#allocation7], 0
    %9 = vsyncpa [#allocation5], 0
    // Predicated region
    $region2: #{tpu_custom_call.1} parent=1 // pred_check
      _
    $region3: #{tpu_custom_call.1} parent=1 // pred_check_branch
      %11 = sbr.rel (0) target = $region5
    $region4: #{tpu_custom_call.1} parent=1 // pred_region
      %s13 = ssub.s32 512, 512
      %14 = vsyncadd [#allocation4], %s13
      %s15 = sshll.u32 [#allocation3], 4
      %s16 = int_to_ptr.vmem [resolvable:$true] %s15
      %21 = dma.hbm_to_vmem [thread:$0]  %s0, 512, %s16, [#allocation4], 128, 128, 8
    $region5: #{tpu_custom_call.1} parent=1 // pred_fallthru
      _
    // Predicated region
    $region6: #{tpu_custom_call.1} parent=1 // pred_check
      _
    $region7: #{tpu_custom_call.1} parent=1 // pred_check_branch
      %23 = sbr.rel (0) target = $region9
    $region8: #{tpu_custom_call.1} parent=1 // pred_region
      %s25 = ssub.s32 1024, 1024
      %26 = vsyncadd [#allocation7], %s25
      %s27 = sshll.u32 [#allocation6], 4
      %s28 = int_to_ptr.vmem [resolvable:$true] %s27
      %33 = dma.hbm_to_vmem [thread:$0]  %s1, 1024, %s28, [#allocation7], 128, 128, 8
    $region9: #{tpu_custom_call.1} parent=1 // pred_fallthru
      _
    // Predicated region
    $region10: #{tpu_custom_call.1} parent=1 // pred_check
      _
    $region11: #{tpu_custom_call.1} parent=1 // pred_check_branch
      %35 = sbr.rel (0) target = $region13
    $region12: #{tpu_custom_call.1} parent=1 // pred_region
      %36 = dma.done [#allocation4], 512
    $region13: #{tpu_custom_call.1} parent=1 // pred_fallthru
      _
    // Predicated region
    $region14: #{tpu_custom_call.1} parent=1 // pred_check
      _
    $region15: #{tpu_custom_call.1} parent=1 // pred_check_branch
      %38 = sbr.rel (0) target = $region17
    $region16: #{tpu_custom_call.1} parent=1 // pred_region
      %39 = dma.done [#allocation7], 1024
    $region17: #{tpu_custom_call.1} parent=1 // pred_fallthru
      _
    %p40 = scmp.eq.s32.totalorder 0, 0
    // Predicated region
    $region18: #{tpu_custom_call.1} parent=1 // pred_check
      %p41 = pneg %p40
    $region19: #{tpu_custom_call.1} parent=1 // pred_check_branch
      %43 = sbr.rel (%p41) target = $region21
    $region20: #{tpu_custom_call.1} parent=1 // pred_region
      %vm44 = vcmask 261120
      %45 = vst.msk [vmem:[#allocation2] sm:$0xff] %vm44, 0.0
      %46 = vst.msk [vmem:[#allocation2 + $0x8] sm:$0xff] %vm44, 0.0
      %47 = vst.msk [vmem:[#allocation2 + $0x10] sm:$0xff] %vm44, 0.0
      %48 = vst.msk [vmem:[#allocation2 + $0x18] sm:$0xff] %vm44, 0.0
    $region21: #{tpu_custom_call.1} parent=1 // pred_fallthru
      _
    %v49 = vld [vmem:[#allocation3] sm:$0xff]
    %v50 = vld [vmem:[#allocation3 + $0x8] sm:$0xff]
    %v51 = vld [vmem:[#allocation3 + $0x10] sm:$0xff]
    %v52 = vld [vmem:[#allocation3 + $0x18] sm:$0xff]
    %v53 = vld [vmem:[#allocation6] sm:$0xff]
    %v54 = vld [vmem:[#allocation6 + $0x8] sm:$0xff]
    %v55 = vld [vmem:[#allocation6 + $0x10] sm:$0xff]
    %v56 = vld [vmem:[#allocation6 + $0x18] sm:$0xff]
    %s57 = scalar_lea.vmem [#allocation6], 32
    %v58 = vld [vmem:[%s57] sm:$0xff]
    %v59 = vld [vmem:[%s57 + $0x8] sm:$0xff]
    %v60 = vld [vmem:[%s57 + $0x10] sm:$0xff]
    %v61 = vld [vmem:[%s57 + $0x18] sm:$0xff]
    %vm62 = vcmask 261120
    %v64 = vsel %vm62, %v49, 0
    %v67 = vsel %vm62, %v50, 0
    %v70 = vsel %vm62, %v51, 0
    %v73 = vsel %vm62, %v52, 0
    %75 = vmatprep.subr.mxu0 0.0
    %76 = vmatpush1.msra.mxu0 %v53
    %77 = vmatprep.subr.mxu0 0.0
    %78 = vmatpush1.msra.mxu0 %v54
    %79 = vmatprep.subr.mxu0 0.0
    %80 = vmatpush1.msra.mxu0 %v55
    %81 = vmatprep.subr.mxu0 0.0
    %82 = vmatpush1.msra.mxu0 %v56
    %83 = vmatprep.subr.mxu0 0.0
    %84 = vmatpush1.msra.mxu0 0.0
    %85 = vmatprep.subr.mxu0 0.0
    %86 = vmatpush1.msra.mxu0 0.0
    %87 = vmatprep.subr.mxu0 0.0
    %88 = vmatpush1.msra.mxu0 0.0
    %89 = vmatprep.subr.mxu0 0.0
    %90 = vmatpush1.msra.mxu0 0.0
    %91 = vmatprep.subr.mxu0 0.0
    %92 = vmatpush1.msra.mxu0 0.0
    %93 = vmatprep.subr.mxu0 0.0
    %94 = vmatpush1.msra.mxu0 0.0
    %95 = vmatprep.subr.mxu0 0.0
    %96 = vmatpush1.msra.mxu0 0.0
    %97 = vmatprep.subr.mxu0 0.0
    %98 = vmatpush1.msra.mxu0 0.0
    %99 = vmatprep.subr.mxu0 0.0
    %100 = vmatpush1.msra.mxu0 0.0
    %101 = vmatprep.subr.mxu0 0.0
    %102 = vmatpush1.msra.mxu0 0.0
    %103 = vmatprep.subr.mxu0 0.0
    %104 = vmatpush1.msra.mxu0 0.0
    %105 = vmatprep.subr.mxu0 0.0
    %106 = vmatpush1.msra.mxu0 0.0
    %107 = vmatprep.subr.mxu0 0.0
    %108 = vmatpush1.msra.mxu0 0.0
    %109 = vmatprep.subr.mxu0 0.0
    %110 = vmatpush1.msra.mxu0 0.0
    %111 = vmatprep.subr.mxu0 0.0
    %112 = vmatpush1.msra.mxu0 0.0
    %113 = vmatprep.subr.mxu0 0.0
    %114 = vmatpush1.msra.mxu0 0.0
    %115 = vmatprep.subr.mxu0 0.0
    %116 = vmatpush1.msra.mxu0 0.0
    %117 = vmatprep.subr.mxu0 0.0
    %118 = vmatpush1.msra.mxu0 0.0
    %119 = vmatprep.subr.mxu0 0.0
    %120 = vmatpush1.msra.mxu0 0.0
    %121 = vmatprep.subr.mxu0 0.0
    %122 = vmatpush1.msra.mxu0 0.0
    %123 = vmatprep.subr.mxu0 0.0
    %124 = vmatpush1.msra.mxu0 0.0
    %125 = vmatprep.subr.mxu0 0.0
    %126 = vmatpush1.msra.mxu0 0.0
    %127 = vmatprep.subr.mxu0 0.0
    %128 = vmatpush1.msra.mxu0 0.0
    %129 = vmatprep.subr.mxu0 0.0
    %130 = vmatpush1.msra.mxu0 0.0
    %131 = vmatprep.subr.mxu0 0.0
    %132 = vmatpush1.msra.mxu0 0.0
    %133 = vmatprep.subr.mxu0 0.0
    %134 = vmatpush1.msra.mxu0 0.0
    %135 = vmatprep.subr.mxu0 0.0
    %136 = vmatpush1.msra.mxu0 0.0
    %137 = vmatprep.subr.mxu0 0.0
    %138 = vmatpush1.msra.mxu0 0.0
    %139 = vmatprep.mubr.f32.mxu0 0.0
    %140 = vmatmul.mubr.f32.gmra.mrb[0].mxu0 %v64
    %v141 = vpop.f32.mrb[0].mxu0
    %v142 = vadd.f32 0.0, %v141
    %v143 = vpop.f32.mrb[0].mxu0
    %144 = vmatprep.mubr.f32.mxu0 0.0
    %145 = vmatmul.mubr.f32.gmra.mrb[0].mxu0 %v67
    %v146 = vpop.f32.mrb[0].mxu0
    %v147 = vadd.f32 0.0, %v146
    %v148 = vpop.f32.mrb[0].mxu0
    %149 = vmatprep.mubr.f32.mxu0 0.0
    %150 = vmatmul.mubr.f32.gmra.mrb[0].mxu0 %v70
    %v151 = vpop.f32.mrb[0].mxu0
    %v152 = vadd.f32 0.0, %v151
    %v153 = vpop.f32.mrb[0].mxu0
    %154 = vmatprep.mubr.f32.mxu0 0.0
    %155 = vmatmul.mubr.f32.gmra.mrb[0].mxu0 %v73
    %v156 = vpop.f32.mrb[0].mxu0
    %v157 = vadd.f32 0.0, %v156
    %v158 = vpop.f32.mrb[0].mxu0
    %159 = vdwg.mxu0
    %160 = vmatprep.subr.mxu0 0.0
    %161 = vmatpush1.msra.mxu0 %v58
    %162 = vmatprep.subr.mxu0 0.0
    %163 = vmatpush1.msra.mxu0 %v59
    %164 = vmatprep.subr.mxu0 0.0
    %165 = vmatpush1.msra.mxu0 %v60
    %166 = vmatprep.subr.mxu0 0.0
    %167 = vmatpush1.msra.mxu0 %v61
    %168 = vmatprep.subr.mxu0 0.0
    %169 = vmatpush1.msra.mxu0 0.0
    %170 = vmatprep.subr.mxu0 0.0
    %171 = vmatpush1.msra.mxu0 0.0
    %172 = vmatprep.subr.mxu0 0.0
    %173 = vmatpush1.msra.mxu0 0.0
    %174 = vmatprep.subr.mxu0 0.0
    %175 = vmatpush1.msra.mxu0 0.0
    %176 = vmatprep.subr.mxu0 0.0
    %177 = vmatpush1.msra.mxu0 0.0
    %178 = vmatprep.subr.mxu0 0.0
    %179 = vmatpush1.msra.mxu0 0.0
    %180 = vmatprep.subr.mxu0 0.0
    %181 = vmatpush1.msra.mxu0 0.0
    %182 = vmatprep.subr.mxu0 0.0
    %183 = vmatpush1.msra.mxu0 0.0
    %184 = vmatprep.subr.mxu0 0.0
    %185 = vmatpush1.msra.mxu0 0.0
    %186 = vmatprep.subr.mxu0 0.0
    %187 = vmatpush1.msra.mxu0 0.0
    %188 = vmatprep.subr.mxu0 0.0
    %189 = vmatpush1.msra.mxu0 0.0
    %190 = vmatprep.subr.mxu0 0.0
    %191 = vmatpush1.msra.mxu0 0.0
    %192 = vmatprep.subr.mxu0 0.0
    %193 = vmatpush1.msra.mxu0 0.0
    %194 = vmatprep.subr.mxu0 0.0
    %195 = vmatpush1.msra.mxu0 0.0
    %196 = vmatprep.subr.mxu0 0.0
    %197 = vmatpush1.msra.mxu0 0.0
    %198 = vmatprep.subr.mxu0 0.0
    %199 = vmatpush1.msra.mxu0 0.0
    %200 = vmatprep.subr.mxu0 0.0
    %201 = vmatpush1.msra.mxu0 0.0
    %202 = vmatprep.subr.mxu0 0.0
    %203 = vmatpush1.msra.mxu0 0.0
    %204 = vmatprep.subr.mxu0 0.0
    %205 = vmatpush1.msra.mxu0 0.0
    %206 = vmatprep.subr.mxu0 0.0
    %207 = vmatpush1.msra.mxu0 0.0
    %208 = vmatprep.subr.mxu0 0.0
    %209 = vmatpush1.msra.mxu0 0.0
    %210 = vmatprep.subr.mxu0 0.0
    %211 = vmatpush1.msra.mxu0 0.0
    %212 = vmatprep.subr.mxu0 0.0
    %213 = vmatpush1.msra.mxu0 0.0
    %214 = vmatprep.subr.mxu0 0.0
    %215 = vmatpush1.msra.mxu0 0.0
    %216 = vmatprep.subr.mxu0 0.0
    %217 = vmatpush1.msra.mxu0 0.0
    %218 = vmatprep.subr.mxu0 0.0
    %219 = vmatpush1.msra.mxu0 0.0
    %220 = vmatprep.subr.mxu0 0.0
    %221 = vmatpush1.msra.mxu0 0.0
    %222 = vmatprep.subr.mxu0 0.0
    %223 = vmatpush1.msra.mxu0 0.0
    %224 = vmatprep.mubr.f32.mxu0 0.0
    %225 = vmatmul.mubr.f32.gmra.mrb[0].mxu0 %v64
    %v226 = vpop.f32.mrb[0].mxu0
    %v227 = vadd.f32 0.0, %v226
    %v228 = vpop.f32.mrb[0].mxu0
    %229 = vmatprep.mubr.f32.mxu0 0.0
    %230 = vmatmul.mubr.f32.gmra.mrb[0].mxu0 %v67
    %v231 = vpop.f32.mrb[0].mxu0
    %v232 = vadd.f32 0.0, %v231
    %v233 = vpop.f32.mrb[0].mxu0
    %234 = vmatprep.mubr.f32.mxu0 0.0
    %235 = vmatmul.mubr.f32.gmra.mrb[0].mxu0 %v70
    %v236 = vpop.f32.mrb[0].mxu0
    %v237 = vadd.f32 0.0, %v236
    %v238 = vpop.f32.mrb[0].mxu0
    %239 = vmatprep.mubr.f32.mxu0 0.0
    %240 = vmatmul.mubr.f32.gmra.mrb[0].mxu0 %v73
    %v241 = vpop.f32.mrb[0].mxu0
    %v242 = vadd.f32 0.0, %v241
    %v243 = vpop.f32.mrb[0].mxu0
    %244 = vdwg.mxu0
    %v245 = vld [vmem:[#allocation2] sm:$0xff]
    %v246 = vld [vmem:[#allocation2 + $0x8] sm:$0xff]
    %v247 = vsub.f32 %v142, %v237
    %v248 = vsub.f32 %v147, %v242
    %v249 = vadd.f32 %v245, %v247
    %v250 = vadd.f32 %v246, %v248
    %251 = vst.msk [vmem:[#allocation2] sm:$0xff] %vm62, %v249
    %252 = vst.msk [vmem:[#allocation2 + $0x8] sm:$0xff] %vm62, %v250
    %s253 = scalar_lea.vmem [#allocation2], 16
    %v254 = vld [vmem:[%s253] sm:$0xff]
    %v255 = vld [vmem:[%s253 + $0x8] sm:$0xff]
    %v256 = vadd.f32 %v152, %v227
    %v257 = vadd.f32 %v157, %v232
    %v258 = vadd.f32 %v254, %v256
    %v259 = vadd.f32 %v255, %v257
    %260 = vst.msk [vmem:[%s253] sm:$0xff] %vm62, %v258
    %261 = vst.msk [vmem:[%s253 + $0x8] sm:$0xff] %vm62, %v259
    // Predicated region
    $region22: #{tpu_custom_call.1} parent=1 // pred_check
      %p262 = pneg %p40
    $region23: #{tpu_custom_call.1} parent=1 // pred_check_branch
      %264 = sbr.rel (%p262) target = $region25
    $region24: #{tpu_custom_call.1} parent=1 // pred_region
      %v265 = vld [vmem:[#allocation2] sm:$0xff]
      %v266 = vld [vmem:[#allocation2 + $0x8] sm:$0xff]
      %v267 = vld [vmem:[#allocation2 + $0x10] sm:$0xff]
      %v268 = vld [vmem:[#allocation2 + $0x18] sm:$0xff]
      %269 = vst.msk [vmem:[#allocation8] sm:$0xff] %vm62, %v265
      %270 = vst.msk [vmem:[#allocation8 + $0x8] sm:$0xff] %vm62, %v266
      %271 = vst.msk [vmem:[#allocation8 + $0x10] sm:$0xff] %vm62, %v267
      %272 = vst.msk [vmem:[#allocation8 + $0x18] sm:$0xff] %vm62, %v268
    $region25: #{tpu_custom_call.1} parent=1 // pred_fallthru
      _
    // Predicated region
    $region26: #{tpu_custom_call.1} parent=1 // pred_check
      _
    $region27: #{tpu_custom_call.1} parent=1 // pred_check_branch
      %274 = sbr.rel (0) target = $region29
    $region28: #{tpu_custom_call.1} parent=1 // pred_region
      %s276 = ssub.s32 512, 512
      %277 = vsyncadd [#allocation5], %s276
      %s278 = sshll.u32 [#allocation8], 4
      %s279 = int_to_ptr.vmem [resolvable:$true] %s278
      %284 = dma.vmem_to_hbm [thread:$0]  %s279, 512, %s2, [#allocation5], 128, 128, 8
    $region29: #{tpu_custom_call.1} parent=1 // pred_fallthru
      _
    // Predicated region
    $region30: #{tpu_custom_call.1} parent=1 // pred_check
      _
    $region31: #{tpu_custom_call.1} parent=1 // pred_check_branch
      %286 = sbr.rel (0) target = $region33
    $region32: #{tpu_custom_call.1} parent=1 // pred_region
      %287 = dma.done [#allocation5], 512
    $region33: #{tpu_custom_call.1} parent=1 // pred_fallthru
      _
    %288 = vsyncpa [#allocation4], 1
    %289 = vsyncpa [#allocation7], 1
    %290 = vsyncpa [#allocation5], 1

</llo_original>
